<compile_context>
chip_gen: v7x
topology: tpu7x:2x2x1
jax: 0.10.0
libtpu: 0.0.40
codegen_flags: <defaults>
</compile_context>

<pallas_src>
import functools

import jax
import jax.numpy as jnp
from jax.experimental import pallas as pl
from jax.experimental.pallas import tpu as pltpu

GAMMA = 2.0        # kernel hard-codes the square below
ALPHA = 0.25
INF_EPS = 1e-09
assert GAMMA == 2.0, "kernel implements gamma=2 as an explicit square"

LANES = 128           # lane width of the flattened slab
MAX_TILE_ROWS = 8192  # (8192,128) f32 = 4 MiB per input per buffer


def _focal_terms(pt, tg, hard_labels):
    """Elementwise focal BCE; gamma=2 as explicit squares (VALU, not EUP pow)."""
    one_m_pt = 1.0 - pt
    if hard_labels:
        # Single-log fast path — exact for binary {0,1} targets: one EUP log
        # per element instead of two, ~half the VALU ops.
        is_pos = tg > 0.5
        p_t = jnp.where(is_pos, pt, one_m_pt)
        w = jnp.where(is_pos, ALPHA, 1.0 - ALPHA)
        one_m_p_t = 1.0 - p_t
        return (-w) * (one_m_p_t * one_m_p_t) * jnp.log(jnp.abs(p_t) + INF_EPS)
    # Soft-label exact form (matches the PyTorch module for arbitrary targets).
    pos = (-ALPHA) * (one_m_pt * one_m_pt) * tg * jnp.log(jnp.abs(pt) + INF_EPS)
    neg = (-(1.0 - ALPHA)) * (pt * pt) * (1.0 - tg) * jnp.log(
        jnp.abs(one_m_pt) + INF_EPS)
    return pos + neg


def _focal_bce_kernel(x_ref, t_ref, out_ref, *, rows_valid, tile_rows,
                      hard_labels):
    pt = x_ref[...].astype(jnp.float32)
    tg = t_ref[...].astype(jnp.float32)
    loss = _focal_terms(pt, tg, hard_labels)   # (tile_rows, LANES)

    def _partial(l):
        # Row-group partial sum: the reshape stays on (8,128) tile boundaries,
        # so this lowers to pure element-wise vreg adds (no XLU cross-lane
        # reduce, no scalar accumulator on the per-step critical path).
        return jnp.sum(l.reshape(tile_rows // 8, 8, LANES), axis=0)

    out_ref[0] = _partial(loss)

    # Ragged last tile: only the final grid step pays for the iota/compare/
    # select.  The unmasked partial written above (which may contain garbage
    # from the out-of-bounds edge rows) is fully overwritten here, so nothing
    # invalid ever reaches the final sum.  Branch resolved at trace time.
    if rows_valid % tile_rows != 0:
        @pl.when(pl.program_id(0) == pl.num_programs(0) - 1)
        def _():
            row0 = pl.program_id(0) * tile_rows
            row_ids = row0 + jax.lax.broadcasted_iota(
                jnp.int32, (tile_rows, LANES), 0)
            out_ref[0] = _partial(jnp.where(row_ids < rows_valid, loss, 0.0))


def focal_bce_loss(inputs, targets, *, hard_labels=False, reduction="mean"):
    """Focal BCE loss (mean/sum reduction). inputs/targets: same shape.

    Set hard_labels=True when targets are binary {0,1} for a single-log fast
    path (mathematically identical for hard labels).  Inputs/targets may be
    narrower dtypes (bf16 / int8 / bool); the kernel upcasts in-kernel.
    """
    assert inputs.shape == targets.shape
    assert reduction in ("mean", "sum")
    total_n = inputs.size

    # Flatten (free for contiguous arrays); keep native dtypes.
    x = inputs.reshape(-1)
    t = targets.reshape(-1)

    rows = total_n // LANES                 # lane-aligned prefix rows
    rem = total_n - rows * LANES            # <128-element tail

    # Sublane alignment for the narrowest input dtype (f32:8, bf16:16, i8:32).
    itemsize = min(jnp.dtype(inputs.dtype).itemsize,
                   jnp.dtype(targets.dtype).itemsize)
    row_align = 8 * (4 // max(1, itemsize))

    if rows < row_align:
        # Tiny input: a kernel launch isn't worth it; pure jnp.
        total = jnp.sum(_focal_terms(x.astype(jnp.float32),
                                     t.astype(jnp.float32), hard_labels))
        return total if reduction == "sum" else total / jnp.float32(total_n)

    # Fold the non-lane-aligned tail with plain jnp ops instead of padding the
    # whole flat array (jnp.pad would be a full HBM read+write copy).
    tail_sum = jnp.float32(0.0)
    if rem:
        tail_sum = jnp.sum(_focal_terms(x[rows * LANES:].astype(jnp.float32),
                                        t[rows * LANES:].astype(jnp.float32),
                                        hard_labels))

    xk = x[:rows * LANES].reshape(rows, LANES)
    tk = t[:rows * LANES].reshape(rows, LANES)

    # Tile sizing: largest block within ~16 MiB of double-buffered pipeline
    # footprint, but at least 2 tiles so the "parallel" grid axis splits across
    # both v7x TensorCores and the pipeline overlaps DMA with compute.
    def _round_up(n, m):
        return ((n + m - 1) // m) * m

    tile_rows = max(row_align,
                    min(MAX_TILE_ROWS, _round_up(pl.cdiv(rows, 2), row_align)))
    n_tiles = pl.cdiv(rows, tile_rows)

    kernel = functools.partial(
        _focal_bce_kernel, rows_valid=rows, tile_rows=tile_rows,
        hard_labels=hard_labels)

    kernel_n = rows * LANES
    in_bytes = kernel_n * (jnp.dtype(inputs.dtype).itemsize
                           + jnp.dtype(targets.dtype).itemsize)
    cost = pl.CostEstimate(
        flops=(8 if hard_labels else 14) * kernel_n,
        transcendentals=(1 if hard_labels else 2) * kernel_n,
        bytes_accessed=in_bytes + n_tiles * 8 * LANES * 4,
    )

    partials = pl.pallas_call(
        kernel,
        out_shape=jax.ShapeDtypeStruct((n_tiles, 8, LANES), jnp.float32),
        grid_spec=pltpu.PrefetchScalarGridSpec(
            num_scalar_prefetch=0,
            grid=(n_tiles,),
            in_specs=[
                pl.BlockSpec((tile_rows, LANES), lambda i: (i, 0)),
                pl.BlockSpec((tile_rows, LANES), lambda i: (i, 0)),
            ],
            out_specs=pl.BlockSpec((1, 8, LANES), lambda i: (i, 0, 0)),
        ),
        compiler_params=pltpu.CompilerParams(
            dimension_semantics=("parallel",),
            vmem_limit_bytes=32 * 1024 * 1024,
        ),
        cost_estimate=cost,
    )(xk, tk)

    # Tiny final reduction (n_tiles * 1024 floats) + mean normalization.
    total = jnp.sum(partials) + tail_sum
    return total if reduction == "sum" else total / jnp.float32(total_n)


def _reference(inputs, targets):
    pt = inputs.astype(jnp.float32)
    tg = targets.astype(jnp.float32)
    loss = (
        -ALPHA * (1.0 - pt) ** GAMMA * tg * jnp.log(jnp.abs(pt) + INF_EPS)
        - (1.0 - ALPHA) * pt ** GAMMA * (1.0 - tg)
        * jnp.log(jnp.abs(1.0 - pt) + INF_EPS)
    )
    return jnp.mean(loss)


if __name__ == "__main__":
    key = jax.random.PRNGKey(0)
    k1, k2 = jax.random.split(key)
    # Predicted probabilities in (0, 1) and binary targets, NCHW.
    shape = (2, 4, 16, 16)
    inputs = jax.random.uniform(k1, shape, dtype=jnp.float32)
    targets = (jax.random.uniform(k2, shape) > 0.5).astype(jnp.float32)

    ref = jax.block_until_ready(_reference(inputs, targets))

    # Exact (soft-label) two-log form.
    loss = jax.block_until_ready(focal_bce_loss(inputs, targets))
    assert jnp.allclose(loss, ref, rtol=1e-5, atol=1e-6), (loss, ref)

    # Hard-label single-log fast path (identical for binary {0,1} targets).
    loss_hard = jax.block_until_ready(
        focal_bce_loss(inputs, targets, hard_labels=True))
    assert jnp.allclose(loss_hard, ref, rtol=1e-5, atol=1e-6), (loss_hard, ref)

    print("KERNEL_OK")
</pallas_src>

<mosaic_0001>
module attributes {stable_mosaic.version = 11 : i64} {
  func.func @_focal_bce_kernel(%arg0: i32, %arg1: memref<8x128xf32, #tpu.memory_space<vmem>>, %arg2: memref<8x128xf32, #tpu.memory_space<vmem>>, %arg3: memref<1x8x128xf32, #tpu.memory_space<vmem>>) attributes {dimension_semantics = [#tpu.dimension_semantics<parallel>], iteration_bounds = array<i64: 2>, scalar_prefetch = 0 : i64, scratch_operands = 0 : i64, tpu.core_type = #tpu.core_type<tc>, window_params = [{transform_indices = @transform_0, window_bounds = array<i64: 8, 128>}, {transform_indices = @transform_1, window_bounds = array<i64: 8, 128>}, {transform_indices = @transform_2, window_bounds = array<i64: 1, 8, 128>}]} {
    %c0 = arith.constant 0 : index
    %c0_0 = arith.constant 0 : index
    %0 = vector.load %arg1[%c0, %c0_0] : memref<8x128xf32, #tpu.memory_space<vmem>>, vector<8x128xf32>
    %c0_1 = arith.constant 0 : index
    %c0_2 = arith.constant 0 : index
    %1 = vector.load %arg2[%c0_1, %c0_2] : memref<8x128xf32, #tpu.memory_space<vmem>>, vector<8x128xf32>
    %cst = arith.constant 1.000000e+00 : f32
    %2 = vector.broadcast %cst : f32 to vector<8x128xf32>
    %3 = arith.subf %2, %0 : vector<8x128xf32>
    %4 = arith.mulf %3, %3 : vector<8x128xf32>
    %cst_3 = arith.constant -2.500000e-01 : f32
    %5 = vector.broadcast %cst_3 : f32 to vector<8x128xf32>
    %6 = arith.mulf %5, %4 : vector<8x128xf32>
    %7 = arith.mulf %6, %1 : vector<8x128xf32>
    %8 = math.absf %0 : vector<8x128xf32>
    %cst_4 = arith.constant 9.99999971E-10 : f32
    %9 = vector.broadcast %cst_4 : f32 to vector<8x128xf32>
    %10 = arith.addf %8, %9 : vector<8x128xf32>
    %11 = math.log %10 : vector<8x128xf32>
    %12 = arith.mulf %7, %11 : vector<8x128xf32>
    %13 = arith.mulf %0, %0 : vector<8x128xf32>
    %cst_5 = arith.constant -7.500000e-01 : f32
    %14 = vector.broadcast %cst_5 : f32 to vector<8x128xf32>
    %15 = arith.mulf %14, %13 : vector<8x128xf32>
    %cst_6 = arith.constant 1.000000e+00 : f32
    %16 = vector.broadcast %cst_6 : f32 to vector<8x128xf32>
    %17 = arith.subf %16, %1 : vector<8x128xf32>
    %18 = arith.mulf %15, %17 : vector<8x128xf32>
    %19 = math.absf %3 : vector<8x128xf32>
    %cst_7 = arith.constant 9.99999971E-10 : f32
    %20 = vector.broadcast %cst_7 : f32 to vector<8x128xf32>
    %21 = arith.addf %19, %20 : vector<8x128xf32>
    %22 = math.log %21 : vector<8x128xf32>
    %23 = arith.mulf %18, %22 : vector<8x128xf32>
    %24 = arith.addf %12, %23 : vector<8x128xf32>
    %25 = vector.shape_cast %24 : vector<8x128xf32> to vector<1x8x128xf32>
    %cst_8 = arith.constant dense<0.000000e+00> : vector<8x128xf32>
    %26 = vector.multi_reduction <add>, %25, %cst_8 [0] : vector<1x8x128xf32> to vector<8x128xf32>
    %c0_9 = arith.constant 0 : index
    %c0_10 = arith.constant 0 : index
    %c0_11 = arith.constant 0 : index
    %27 = vector.load %arg3[%c0_9, %c0_10, %c0_11] : memref<1x8x128xf32, #tpu.memory_space<vmem>>, vector<1x8x128xf32>
    %28 = vector.shape_cast %27 : vector<1x8x128xf32> to vector<8x128xf32>
    %29 = vector.shape_cast %26 : vector<8x128xf32> to vector<1x8x128xf32>
    tpu.vector_store %arg3[%c0_9, %c0_10, %c0_11], %29 {strides = array<i32>} : memref<1x8x128xf32, #tpu.memory_space<vmem>>, vector<1x8x128xf32>,
    return
  }
  func.func @transform_0(%arg0: i32) -> (i32, i32) {
    %c0_i32 = arith.constant 0 : i32
    %c0_i32_0 = arith.constant 0 : i32
    return %arg0, %c0_i32 : i32, i32
  }
  func.func @transform_1(%arg0: i32) -> (i32, i32) {
    %c0_i32 = arith.constant 0 : i32
    %c0_i32_0 = arith.constant 0 : i32
    return %arg0, %c0_i32 : i32, i32
  }
  func.func @transform_2(%arg0: i32) -> (i32, i32, i32) {
    %c0_i32 = arith.constant 0 : i32
    %c0_i32_0 = arith.constant 0 : i32
    %c0_i32_1 = arith.constant 0 : i32
    return %arg0, %c0_i32, %c0_i32_0 : i32, i32, i32
  }
}

</mosaic_0001>

<llo_original>
// kernel: tpu_custom_call.1
$region0: #{tpu_custom_call.1}
  #allocation0 [shape = 'u32[]', space=smem, size = 0x4, offset = 0x4, fixed_abs, tag = 'smem constant byte address 0x4 - core index']
  #allocation1 [shape = 'u32[144,128]{1,0:T(1,128)}', space=vmem, size = 0x12000, scoped, tag = 'internal scratch']
  %s0 = inlined_call_operand.hbm [shape: f32[16,128], index: 0, kind: input, shape index: {}]
  %s1 = inlined_call_operand.hbm [shape: f32[16,128], index: 1, kind: input, shape index: {}]
  %s2 = inlined_call_operand.hbm [shape: f32[2,8,128], index: 2, kind: output, shape index: {}]
  %s3 = sld [smem:[#allocation0]]
  $region49: #{tpu_custom_call.1} parent=0
    _
  %s5 = ssub.s32 1, %s3
  %s6 = scalar_select 0, %s5, %s3
  $region1: #{tpu_custom_call.1} parent=0
    #allocation2 [shape = 'u8[8192]{0}', space=vmem, size = 0x2000, scoped, tag = 'input window, operand 0']
    #allocation3 [shape = 's32[2]{0}', space=sflag, size = 0x8, scoped, tag = 'scoped memory for tpu_custom_call.1']
    #allocation4 [shape = 's32[2]{0}', space=sflag, size = 0x8, scoped, tag = 'scoped memory for tpu_custom_call.1']
    #allocation5 [shape = 'u8[8192]{0}', space=vmem, size = 0x2000, scoped, tag = 'input window, operand 1']
    #allocation6 [shape = 's32[2]{0}', space=sflag, size = 0x8, scoped, tag = 'scoped memory for tpu_custom_call.1']
    #allocation7 [shape = 'u8[8192]{0}', space=vmem, size = 0x2000, scoped, tag = 'output window, operand 0']
    %7 = vsyncpa [#allocation3], 0
    %s8 = scalar_lea.sflag [#allocation3], 1
    %9 = vsyncpa %s8, 0
    %10 = vsyncpa [#allocation6], 0
    %s11 = scalar_lea.sflag [#allocation6], 1
    %12 = vsyncpa %s11, 0
    %13 = vsyncpa [#allocation4], 0
    %s14 = scalar_lea.sflag [#allocation4], 1
    %15 = vsyncpa %s14, 0
    loop: start=0, step=1, limit=4
    $region2: #{tpu_custom_call.1} parent=1 // loop_pre_header
      _
    $region3: #{tpu_custom_call.1} parent=1 // loop_header
      %s17 = sphi 0, %s21
      %p18 = scmp.ge.s32.totalorder %s17, 4
      %s27 = sphi 0, %s29
      %s30 = sphi 0, %s27
      %s31 = sphi 0, %s30
      %s47 = sphi 0, %s31
      %s53 = sphi 0, %s55
      %s56 = sphi 0, %s53
      %s57 = sphi 0, %s56
      %s73 = sphi 0, %s57
      %s79 = sphi 0, %s81
      %s82 = sphi 0, %s79
      %s83 = sphi 0, %s82
      %s99 = sphi 0, %s83
    $region4: #{tpu_custom_call.1} parent=1 // loop_header_branch
      %20 = sbr.rel (%p18) target = $region8
    $region5: #{tpu_custom_call.1} parent=1 // loop_body
      %s22 = ssub.s32 %s17, 1
      %s23 = ssub.s32 %s17, 2
      %s24 = sadd.s32 %s17, 1
      %s25 = ssub.s32 %s17, %s24
      %p26 = scmp.eq.s32.totalorder %s25, 0
      %s28 = sadd.s32 %s27, 1
      %s29 = scalar_select %p26, %s27, %s28
      %p32 = pneg %p26
      %p33 = scmp.eq.s32.totalorder %s17, 1
      %p34 = por %p32, %p33
      %p35 = scmp.ne.s32.totalorder %s27, %s30
      %p36 = scmp.eq.s32.totalorder %s17, 0
      %p37 = por %p35, %p36
      %p38 = scmp.ne.s32.totalorder %s27, %s30
      %p39 = scmp.eq.s32.totalorder %s22, 1
      %p40 = por %p38, %p39
      %p41 = scmp.ne.s32.totalorder %s30, %s31
      %p42 = scmp.eq.s32.totalorder %s22, 0
      %p43 = por %p41, %p42
      %p44 = scmp.ne.s32.totalorder %s30, %s31
      %p45 = scmp.eq.s32.totalorder %s23, 1
      %p46 = por %p44, %p45
      %p48 = scmp.ne.s32.totalorder %s31, %s47
      %p49 = scmp.eq.s32.totalorder %s23, 0
      %p50 = por %p48, %p49
      %s51 = ssub.s32 %s17, %s24
      %p52 = scmp.eq.s32.totalorder %s51, 0
      %s54 = sadd.s32 %s53, 1
      %s55 = scalar_select %p52, %s53, %s54
      %p58 = pneg %p52
      %p59 = scmp.eq.s32.totalorder %s17, 1
      %p60 = por %p58, %p59
      %p61 = scmp.ne.s32.totalorder %s53, %s56
      %p62 = scmp.eq.s32.totalorder %s17, 0
      %p63 = por %p61, %p62
      %p64 = scmp.ne.s32.totalorder %s53, %s56
      %p65 = scmp.eq.s32.totalorder %s22, 1
      %p66 = por %p64, %p65
      %p67 = scmp.ne.s32.totalorder %s56, %s57
      %p68 = scmp.eq.s32.totalorder %s22, 0
      %p69 = por %p67, %p68
      %p70 = scmp.ne.s32.totalorder %s56, %s57
      %p71 = scmp.eq.s32.totalorder %s23, 1
      %p72 = por %p70, %p71
      %p74 = scmp.ne.s32.totalorder %s57, %s73
      %p75 = scmp.eq.s32.totalorder %s23, 0
      %p76 = por %p74, %p75
      %s77 = ssub.s32 %s17, %s24
      %p78 = scmp.eq.s32.totalorder %s77, 0
      %s80 = sadd.s32 %s79, 1
      %s81 = scalar_select %p78, %s79, %s80
      %p84 = pneg %p78
      %p85 = scmp.eq.s32.totalorder %s17, 1
      %p86 = por %p84, %p85
      %p87 = scmp.ne.s32.totalorder %s79, %s82
      %p88 = scmp.eq.s32.totalorder %s17, 0
      %p89 = por %p87, %p88
      %p90 = scmp.ne.s32.totalorder %s79, %s82
      %p91 = scmp.eq.s32.totalorder %s22, 1
      %p92 = por %p90, %p91
      %p93 = scmp.ne.s32.totalorder %s82, %s83
      %p94 = scmp.eq.s32.totalorder %s22, 0
      %p95 = por %p93, %p94
      %p96 = scmp.ne.s32.totalorder %s82, %s83
      %p97 = scmp.eq.s32.totalorder %s23, 1
      %p98 = por %p96, %p97
      %p100 = scmp.ne.s32.totalorder %s83, %s99
      %p101 = scmp.eq.s32.totalorder %s23, 0
      %p102 = por %p100, %p101
      %p103 = scmp.le.s32.totalorder 1, %s17
      %p104 = scmp.lt.s32.totalorder %s17, 3
      %p105 = pnand %p103, %p104
      %p106 = pneg %p105
      // Predicated region
      $region9: #{tpu_custom_call.1} parent=5 // pred_check
        _
      $region10: #{tpu_custom_call.1} parent=5 // pred_check_branch
        %108 = sbr.rel (%p105) target = $region12
      $region11: #{tpu_custom_call.1} parent=5 // pred_region
        %s109 = ssub.s32 %s17, 1
      $region12: #{tpu_custom_call.1} parent=5 // pred_fallthru
        _
      %p110 = scmp.lt.s32.totalorder %s17, 2
      // Predicated region
      $region13: #{tpu_custom_call.1} parent=5 // pred_check
        %p111 = pneg %p110
      $region14: #{tpu_custom_call.1} parent=5 // pred_check_branch
        %113 = sbr.rel (%p111) target = $region16
      $region15: #{tpu_custom_call.1} parent=5 // pred_region
        // Predicated region
        $region17: #{tpu_custom_call.1} parent=15 // pred_check
          %p114 = pneg %p37
        $region18: #{tpu_custom_call.1} parent=15 // pred_check_branch
          %116 = sbr.rel (%p114) target = $region20
        $region19: #{tpu_custom_call.1} parent=15 // pred_region
          %s117 = sand.u32 %s27, 1
          %s118 = scalar_lea.sflag [#allocation3], %s117
          %s119 = sand.u32 %s27, 1
          %s120 = smul.addr %s119, 8
          %s121 = scalar_lea.vmem [#allocation2], %s120
          %s123 = ssub.s32 128, 128
          %124 = vsyncadd %s118, %s123
          %s125 = smul.addr %s17, 128
          %s126 = scalar_lea.hbm %s0, %s125
          %s128 = sshll.u32 %s121, 4
          %s129 = int_to_ptr.vmem [resolvable:$true] %s128
          %131 = dma.hbm_to_vmem [thread:$0]  %s126, 128, %s129, %s118
        $region20: #{tpu_custom_call.1} parent=15 // pred_fallthru
          _
        // Predicated region
        $region21: #{tpu_custom_call.1} parent=15 // pred_check
          %p132 = pneg %p63
        $region22: #{tpu_custom_call.1} parent=15 // pred_check_branch
          %134 = sbr.rel (%p132) target = $region24
        $region23: #{tpu_custom_call.1} parent=15 // pred_region
          %s135 = sand.u32 %s53, 1
          %s136 = scalar_lea.sflag [#allocation6], %s135
          %s137 = sand.u32 %s53, 1
          %s138 = smul.addr %s137, 8
          %s139 = scalar_lea.vmem [#allocation5], %s138
          %s141 = ssub.s32 128, 128
          %142 = vsyncadd %s136, %s141
          %s143 = smul.addr %s17, 128
          %s144 = scalar_lea.hbm %s1, %s143
          %s146 = sshll.u32 %s139, 4
          %s147 = int_to_ptr.vmem [resolvable:$true] %s146
          %149 = dma.hbm_to_vmem [thread:$0]  %s144, 128, %s147, %s136
        $region24: #{tpu_custom_call.1} parent=15 // pred_fallthru
          _
      $region16: #{tpu_custom_call.1} parent=5 // pred_fallthru
        _
      %p150 = scmp.le.s32.totalorder 1, %s17
      %p151 = scmp.lt.s32.totalorder %s17, 3
      %p152 = pnand %p150, %p151
      %p153 = pneg %p152
      // Predicated region
      $region25: #{tpu_custom_call.1} parent=5 // pred_check
        _
      $region26: #{tpu_custom_call.1} parent=5 // pred_check_branch
        %155 = sbr.rel (%p152) target = $region28
      $region27: #{tpu_custom_call.1} parent=5 // pred_region
        %s156 = ssub.s32 %s17, 1
        %s157 = sand.u32 %s30, 1
        %s158 = scalar_lea.sflag [#allocation3], %s157
        %s159 = sand.u32 %s30, 1
        %s160 = smul.addr %s159, 8
        %s161 = scalar_lea.vmem [#allocation2], %s160
        // Predicated region
        $region29: #{tpu_custom_call.1} parent=27 // pred_check
          %p162 = pneg %p43
        $region30: #{tpu_custom_call.1} parent=27 // pred_check_branch
          %164 = sbr.rel (%p162) target = $region32
        $region31: #{tpu_custom_call.1} parent=27 // pred_region
          %165 = dma.done %s158, 128
        $region32: #{tpu_custom_call.1} parent=27 // pred_fallthru
          _
        %s166 = sand.u32 %s56, 1
        %s167 = scalar_lea.sflag [#allocation6], %s166
        %s168 = sand.u32 %s56, 1
        %s169 = smul.addr %s168, 8
        %s170 = scalar_lea.vmem [#allocation5], %s169
        // Predicated region
        $region33: #{tpu_custom_call.1} parent=27 // pred_check
          %p171 = pneg %p69
        $region34: #{tpu_custom_call.1} parent=27 // pred_check_branch
          %173 = sbr.rel (%p171) target = $region36
        $region35: #{tpu_custom_call.1} parent=27 // pred_region
          %174 = dma.done %s167, 128
        $region36: #{tpu_custom_call.1} parent=27 // pred_fallthru
          _
        %s175 = sand.u32 %s30, 1
        %s176 = scalar_lea.sflag [#allocation3], %s175
        %s177 = sand.u32 %s30, 1
        %s178 = smul.addr %s177, 8
        %s179 = scalar_lea.vmem [#allocation2], %s178
        %p180 = pneg %p43
        %p181 = pneg %p40
        %s182 = sand.u32 %s56, 1
        %s183 = scalar_lea.sflag [#allocation6], %s182
        %s184 = sand.u32 %s56, 1
        %s185 = smul.addr %s184, 8
        %s186 = scalar_lea.vmem [#allocation5], %s185
        %p187 = pneg %p69
        %p188 = pneg %p66
        %p189 = pneg %p95
        %p190 = pneg %p92
        %s191 = sand.u32 %s82, 1
        %s192 = scalar_lea.sflag [#allocation4], %s191
        %s193 = sand.u32 %s82, 1
        %s194 = smul.addr %s193, 8
        %s195 = scalar_lea.vmem [#allocation7], %s194
        %v196 = vld [vmem:[%s161] sm:$0xff]
        %v197 = vld [vmem:[%s170] sm:$0xff]
        %v198 = vsub.f32 1.0, %v196
        %v199 = vmul.f32 %v198, %v198
        %v200 = vmul.f32 %v199, -0.25
        %v201 = vmul.f32 %v200, %v197
        %v202 = vand.u32 2147483647, %v196
        %v203 = vadd.f32 %v202, 1e-09
        %v204 = vlog2.pop %v203
        %v205 = vmul.f32 %v204, 0.6931472
        %v206 = vmul.f32 %v201, %v205
        %v207 = vmul.f32 %v196, %v196
        %v208 = vmul.f32 %v207, -0.75
        %v209 = vsub.f32 1.0, %v197
        %v210 = vmul.f32 %v208, %v209
        %v211 = vand.u32 2147483647, %v198
        %v212 = vadd.f32 %v211, 1e-09
        %v213 = vlog2.pop %v212
        %v214 = vmul.f32 %v213, 0.6931472
        %v215 = vmul.f32 %v210, %v214
        %v216 = vadd.f32 %v206, %v215
        %v217 = vadd.f32 %v216, 0.0
        %218 = vst [vmem:[%s195] sm:$0xff] %v217
        %s219 = sand.u32 %s82, 1
        %s220 = scalar_lea.sflag [#allocation4], %s219
        %s221 = sand.u32 %s82, 1
        %s222 = smul.addr %s221, 8
        %s223 = scalar_lea.vmem [#allocation7], %s222
        // Predicated region
        $region37: #{tpu_custom_call.1} parent=27 // pred_check
          %p224 = pneg %p92
        $region38: #{tpu_custom_call.1} parent=27 // pred_check_branch
          %226 = sbr.rel (%p224) target = $region40
        $region39: #{tpu_custom_call.1} parent=27 // pred_region
          %s228 = ssub.s32 128, 128
          %229 = vsyncadd %s220, %s228
          %s230 = smul.addr %s22, 128
          %s231 = scalar_lea.hbm %s2, %s230
          %s233 = sshll.u32 %s223, 4
          %s234 = int_to_ptr.vmem [resolvable:$true] %s233
          %236 = dma.vmem_to_hbm [thread:$0]  %s234, 128, %s231, %s220
        $region40: #{tpu_custom_call.1} parent=27 // pred_fallthru
          _
      $region28: #{tpu_custom_call.1} parent=5 // pred_fallthru
        _
      %p237 = scmp.le.s32.totalorder 2, %s17
      // Predicated region
      $region41: #{tpu_custom_call.1} parent=5 // pred_check
        %p238 = pneg %p237
      $region42: #{tpu_custom_call.1} parent=5 // pred_check_branch
        %240 = sbr.rel (%p238) target = $region44
      $region43: #{tpu_custom_call.1} parent=5 // pred_region
        %s241 = ssub.s32 %s17, 2
        // Predicated region
        $region45: #{tpu_custom_call.1} parent=43 // pred_check
          %p242 = pneg %p98
        $region46: #{tpu_custom_call.1} parent=43 // pred_check_branch
          %244 = sbr.rel (%p242) target = $region48
        $region47: #{tpu_custom_call.1} parent=43 // pred_region
          %s245 = sand.u32 %s83, 1
          %s246 = scalar_lea.sflag [#allocation4], %s245
          %s247 = sand.u32 %s83, 1
          %s248 = smul.addr %s247, 8
          %s249 = scalar_lea.vmem [#allocation7], %s248
          %250 = dma.done %s246, 128
        $region48: #{tpu_custom_call.1} parent=43 // pred_fallthru
          _
      $region44: #{tpu_custom_call.1} parent=5 // pred_fallthru
        _
    $region6: #{tpu_custom_call.1} parent=1 // loop_footer
      %s21 = sadd.s32 1, %s17
    $region7: #{tpu_custom_call.1} parent=1 // loop_footer_branch
      %16 = sbr.rel target = $region3
    $region8: #{tpu_custom_call.1} parent=1 // loop_exit
      _
    %251 = vsyncpa [#allocation3], 1
    %s252 = scalar_lea.sflag [#allocation3], 1
    %253 = vsyncpa %s252, 1
    %254 = vsyncpa [#allocation6], 1
    %s255 = scalar_lea.sflag [#allocation6], 1
    %256 = vsyncpa %s255, 1
    %257 = vsyncpa [#allocation4], 1
    %s258 = scalar_lea.sflag [#allocation4], 1
    %259 = vsyncpa %s258, 1

</llo_original>
